<compile_context>
chip_gen: v7x
topology: tpu7x:2x2x1
jax: 0.10.0
libtpu: 0.0.40
codegen_flags: <defaults>
</compile_context>

<pallas_src>
import jax
import jax.numpy as jnp
from jax.experimental import pallas as pl
from jax.experimental.pallas import tpu as pltpu

EPS = 1e-6


def _encoder_norm_kernel(alpha_ref, bias_ref, x_ref, o_ref):
    # x_ref: (tile_rows, D) VMEM tile; alpha_ref / bias_ref: (1,) scalars in SMEM.
    x = x_ref[...].astype(jnp.float32)
    d = x.shape[-1]

    mean = jnp.mean(x, axis=-1, keepdims=True)
    diff = x - mean                                   # only lives through the reduction
    # torch.std default is unbiased (Bessel's correction, divide by D-1). Requires D >= 2.
    var = jnp.sum(diff * diff, axis=-1, keepdims=True) * (1.0 / (d - 1))
    std = jnp.sqrt(var)

    # One exact reciprocal per row (EUP slot) instead of D divides per row (VALU);
    # fold alpha and the mean into a per-row affine so the epilogue is a single mul+add on x.
    inv = pl.reciprocal(std + EPS, approx=False)      # (tile_rows, 1)
    row_scale = alpha_ref[0] * inv
    row_offset = bias_ref[0] - row_scale * mean
    o_ref[...] = (row_scale * x + row_offset).astype(o_ref.dtype)


def _vmem_budget_bytes():
    """Generation-aware scoped-VMEM limit for this kernel."""
    cap = None
    try:
        cap = pltpu.get_tpu_info().vmem_capacity_bytes
    except Exception:
        cap = None
    if not cap or cap <= 0:
        cap = 64 * 1024 * 1024        # conservative fallback: assume v7x-sized VMEM (64 MiB)
    # Use ~3/4 of physical VMEM, never more than 96 MiB:
    #   v7x  (64 MiB)   -> 48 MiB limit, ~8 MiB per double-buffered tile
    #   v5e/v6e (128 MiB)-> 96 MiB limit, ~16 MiB per double-buffered tile
    return min((cap * 3) // 4, 96 * 1024 * 1024)


def _choose_row_tile(n_rows, d, itemsize, per_buffer_bytes, *, min_steps=8):
    """Row-tile size: fill the per-buffer VMEM budget, dtype-aware sublane alignment,
    and keep at least ~min_steps grid steps so megacore + the DMA pipeline have work."""
    row_align = max(8, 32 // max(1, itemsize))        # f32 -> 8, bf16 -> 16, int8 -> 32
    rows = per_buffer_bytes // max(1, d * itemsize)
    rows = max(row_align, (rows // row_align) * row_align)
    # Best-effort: split small inputs into >= min_steps tiles (v7x has 2 TCs; grid=(1,)
    # would leave one idle and kill DMA/compute overlap).
    rows_for_steps = pl.cdiv(n_rows, min_steps)
    rows_for_steps = ((rows_for_steps + row_align - 1) // row_align) * row_align
    rows = min(rows, rows_for_steps)
    return max(rows, row_align)


def encoder_forward(x, mask, alpha, bias, *, donate_x=False):
    """Encoder forward pass. `mask` is unused because the layer stack is empty."""
    del mask  # only consumed by the (absent) EncoderBlock layers
    B, S, D = x.shape
    N = B * S

    x2 = x.reshape(N, D)
    alpha1 = alpha.reshape(1).astype(jnp.float32)
    bias1 = bias.reshape(1).astype(jnp.float32)

    itemsize = jnp.dtype(x.dtype).itemsize
    vmem_limit = _vmem_budget_bytes()
    per_buffer_bytes = vmem_limit // 6                # 2x in + 2x out double-buffers + headroom
    tile_rows = _choose_row_tile(N, D, itemsize, per_buffer_bytes)
    grid = (pl.cdiv(N, tile_rows),)

    cost = pl.CostEstimate(
        flops=7 * N * D,                              # mean, diff, sq, sum, scale, add (rough)
        transcendentals=2 * N,                        # one sqrt + one reciprocal per row
        bytes_accessed=2 * N * D * itemsize,
    )

    extra = {}
    if donate_x:
        # Alias x to the output when the caller no longer needs x (saves an HBM buffer).
        extra["input_output_aliases"] = {2: 0}

    grid_spec = pltpu.PrefetchScalarGridSpec(
        num_scalar_prefetch=0,
        grid=grid,
        in_specs=[
            pl.BlockSpec(memory_space=pltpu.MemorySpace.SMEM),   # alpha (scalar)
            pl.BlockSpec(memory_space=pltpu.MemorySpace.SMEM),   # bias  (scalar)
            pl.BlockSpec((tile_rows, D), lambda i: (i, 0)),      # x row tile
        ],
        out_specs=pl.BlockSpec((tile_rows, D), lambda i: (i, 0)),
    )

    out2 = pl.pallas_call(
        _encoder_norm_kernel,
        out_shape=jax.ShapeDtypeStruct((N, D), x.dtype),
        grid_spec=grid_spec,
        compiler_params=pltpu.CompilerParams(
            dimension_semantics=("parallel",),
            vmem_limit_bytes=vmem_limit,
        ),
        cost_estimate=cost,
        **extra,
    )(alpha1, bias1, x2)

    return out2.reshape(B, S, D)


def encoder_forward_ref(x, mask, alpha, bias):
    """Pure-JAX reference matching the PyTorch module."""
    del mask
    x = x.astype(jnp.float32)
    mean = jnp.mean(x, axis=-1, keepdims=True)
    d = x.shape[-1]
    var = jnp.sum((x - mean) ** 2, axis=-1, keepdims=True) / (d - 1)
    std = jnp.sqrt(var)
    return alpha[0] * (x - mean) / (std + EPS) + bias[0]


if __name__ == "__main__":
    key = jax.random.PRNGKey(0)
    B, S, D = 2, 8, 32
    kx, km = jax.random.split(key)
    x = jax.random.normal(kx, (B, S, D), dtype=jnp.float32)
    mask = jnp.ones((B, 1, S, S), dtype=jnp.float32)  # unused (no encoder blocks)

    # Deterministic parameter init matching nn.Parameter(torch.ones(1))
    alpha = jnp.ones((1,), dtype=jnp.float32)
    bias = jnp.ones((1,), dtype=jnp.float32)

    out = encoder_forward(x, mask, alpha, bias)
    out = jax.block_until_ready(out)

    ref = encoder_forward_ref(x, mask, alpha, bias)
    assert out.shape == (B, S, D)
    assert jnp.allclose(out, ref, atol=1e-5, rtol=1e-5), "mismatch vs reference"

    print("KERNEL_OK")
</pallas_src>

<mosaic_0001>
module attributes {stable_mosaic.version = 11 : i64} {
  func.func @_encoder_norm_kernel(%arg0: i32, %arg1: memref<1xf32, #tpu.memory_space<smem>>, %arg2: memref<1xf32, #tpu.memory_space<smem>>, %arg3: memref<8x32xf32, #tpu.memory_space<vmem>>, %arg4: memref<8x32xf32, #tpu.memory_space<vmem>>) attributes {dimension_semantics = [#tpu.dimension_semantics<parallel>], iteration_bounds = array<i64: 2>, scalar_prefetch = 0 : i64, scratch_operands = 0 : i64, tpu.core_type = #tpu.core_type<tc>, window_params = [{transform_indices = @transform_0, window_bounds = array<i64: 1>}, {transform_indices = @transform_1, window_bounds = array<i64: 1>}, {transform_indices = @transform_2, window_bounds = array<i64: 8, 32>}, {transform_indices = @transform_3, window_bounds = array<i64: 8, 32>}]} {
    %c0 = arith.constant 0 : index
    %c0_0 = arith.constant 0 : index
    %0 = vector.load %arg3[%c0, %c0_0] : memref<8x32xf32, #tpu.memory_space<vmem>>, vector<8x32xf32>
    %cst = arith.constant dense<0.000000e+00> : vector<8xf32>
    %1 = vector.multi_reduction <add>, %0, %cst [1] : vector<8x32xf32> to vector<8xf32>
    %2 = vector.shape_cast %1 : vector<8xf32> to vector<8x1xf32>
    %cst_1 = arith.constant 3.200000e+01 : f32
    %3 = vector.broadcast %cst_1 : f32 to vector<8x1xf32>
    %4 = arith.divf %2, %3 : vector<8x1xf32>
    %5 = vector.broadcast %4 : vector<8x1xf32> to vector<8x32xf32>
    %6 = arith.subf %0, %5 : vector<8x32xf32>
    %7 = arith.mulf %6, %6 : vector<8x32xf32>
    %cst_2 = arith.constant dense<0.000000e+00> : vector<8xf32>
    %8 = vector.multi_reduction <add>, %7, %cst_2 [1] : vector<8x32xf32> to vector<8xf32>
    %9 = vector.shape_cast %8 : vector<8xf32> to vector<8x1xf32>
    %cst_3 = arith.constant 0.0322580636 : f32
    %10 = vector.broadcast %cst_3 : f32 to vector<8x1xf32>
    %11 = arith.mulf %9, %10 : vector<8x1xf32>
    %12 = math.sqrt %11 : vector<8x1xf32>
    %cst_4 = arith.constant 9.99999997E-7 : f32
    %13 = vector.broadcast %cst_4 : f32 to vector<8x1xf32>
    %14 = arith.addf %12, %13 : vector<8x1xf32>
    %15 = tpu.reciprocal %14 : vector<8x1xf32> -> vector<8x1xf32>
    %c0_5 = arith.constant 0 : index
    %16 = memref.load %arg1[%c0_5] : memref<1xf32, #tpu.memory_space<smem>>
    %17 = vector.broadcast %16 : f32 to vector<8x1xf32>
    %18 = arith.mulf %17, %15 : vector<8x1xf32>
    %c0_6 = arith.constant 0 : index
    %19 = memref.load %arg2[%c0_6] : memref<1xf32, #tpu.memory_space<smem>>
    %20 = arith.mulf %18, %4 : vector<8x1xf32>
    %21 = vector.broadcast %19 : f32 to vector<8x1xf32>
    %22 = arith.subf %21, %20 : vector<8x1xf32>
    %23 = vector.broadcast %18 : vector<8x1xf32> to vector<8x32xf32>
    %24 = arith.mulf %23, %0 : vector<8x32xf32>
    %25 = vector.broadcast %22 : vector<8x1xf32> to vector<8x32xf32>
    %26 = arith.addf %24, %25 : vector<8x32xf32>
    %c0_7 = arith.constant 0 : index
    %c0_8 = arith.constant 0 : index
    %27 = vector.load %arg4[%c0_7, %c0_8] : memref<8x32xf32, #tpu.memory_space<vmem>>, vector<8x32xf32>
    tpu.vector_store %arg4[%c0_7, %c0_8], %26 {strides = array<i32>} : memref<8x32xf32, #tpu.memory_space<vmem>>, vector<8x32xf32>,
    return
  }
  func.func @transform_0(%arg0: i32) -> i32 {
    %c0_i32 = arith.constant 0 : i32
    %c0_i32_0 = arith.constant 0 : i32
    return %c0_i32 : i32
  }
  func.func @transform_1(%arg0: i32) -> i32 {
    %c0_i32 = arith.constant 0 : i32
    %c0_i32_0 = arith.constant 0 : i32
    return %c0_i32 : i32
  }
  func.func @transform_2(%arg0: i32) -> (i32, i32) {
    %c0_i32 = arith.constant 0 : i32
    %c0_i32_0 = arith.constant 0 : i32
    return %arg0, %c0_i32 : i32, i32
  }
  func.func @transform_3(%arg0: i32) -> (i32, i32) {
    %c0_i32 = arith.constant 0 : i32
    %c0_i32_0 = arith.constant 0 : i32
    return %arg0, %c0_i32 : i32, i32
  }
}

</mosaic_0001>

<llo_original>
// kernel: tpu_custom_call.1
$region0: #{tpu_custom_call.1}
  #allocation0 [shape = 'u32[]', space=smem, size = 0x4, offset = 0x4, fixed_abs, tag = 'smem constant byte address 0x4 - core index']
  #allocation1 [shape = 'u32[144,128]{1,0:T(1,128)}', space=vmem, size = 0x12000, scoped, tag = 'internal scratch']
  #allocation2 [shape = 'f32[1]{0:T(128)S(6)}', space=smem, size = 0x200, scoped, tag = 'scoped memory for tpu_custom_call.1']
  #allocation3 [shape = 'f32[1]{0:T(128)S(6)}', space=smem, size = 0x200, scoped, tag = 'scoped memory for tpu_custom_call.1']
  %s0 = inlined_call_operand.<no memory space> [shape: f32[1], index: 0, kind: input, shape index: {}]
  %s1 = inlined_call_operand.<no memory space> [shape: f32[1], index: 1, kind: input, shape index: {}]
  %s2 = inlined_call_operand.hbm [shape: f32[16,32], index: 2, kind: input, shape index: {}]
  %s3 = inlined_call_operand.hbm [shape: f32[16,32], index: 3, kind: output, shape index: {}]
  %s4 = sld [smem:[#allocation0]]
  $region49: #{tpu_custom_call.1} parent=0
    _
  %s6 = ssub.s32 1, %s4
  %s7 = scalar_select 0, %s6, %s4
  %8 = sst [smem:[#allocation2]] %s0
  %9 = sst [smem:[#allocation3]] %s1
  $region1: #{tpu_custom_call.1} parent=0
    #allocation4 [shape = 'u8[8192]{0}', space=vmem, size = 0x2000, scoped, tag = 'input window, operand 2']
    #allocation5 [shape = 's32[2]{0}', space=sflag, size = 0x8, scoped, tag = 'scoped memory for tpu_custom_call.1']
    #allocation6 [shape = 's32[2]{0}', space=sflag, size = 0x8, scoped, tag = 'scoped memory for tpu_custom_call.1']
    #allocation7 [shape = 'u8[8192]{0}', space=vmem, size = 0x2000, scoped, tag = 'output window, operand 0']
    %10 = vsyncpa [#allocation5], 0
    %s11 = scalar_lea.sflag [#allocation5], 1
    %12 = vsyncpa %s11, 0
    %13 = vsyncpa [#allocation6], 0
    %s14 = scalar_lea.sflag [#allocation6], 1
    %15 = vsyncpa %s14, 0
    loop: start=0, step=1, limit=4
    $region2: #{tpu_custom_call.1} parent=1 // loop_pre_header
      _
    $region3: #{tpu_custom_call.1} parent=1 // loop_header
      %s17 = sphi 0, %s21
      %p18 = scmp.ge.s32.totalorder %s17, 4
      %s25 = sphi 0, %s25
      %s27 = sphi 0, %s25
      %s28 = sphi 0, %s27
      %s42 = sphi 0, %s28
      %s46 = sphi 0, %s46
      %s48 = sphi 0, %s46
      %s49 = sphi 0, %s48
      %s63 = sphi 0, %s49
      %s69 = sphi 0, %s71
      %s72 = sphi 0, %s69
      %s73 = sphi 0, %s72
      %s89 = sphi 0, %s73
      %s95 = sphi 0, %s97
      %s98 = sphi 0, %s95
      %s99 = sphi 0, %s98
      %s115 = sphi 0, %s99
    $region4: #{tpu_custom_call.1} parent=1 // loop_header_branch
      %20 = sbr.rel (%p18) target = $region8
    $region5: #{tpu_custom_call.1} parent=1 // loop_body
      %s22 = ssub.s32 %s17, 1
      %s23 = ssub.s32 %s17, 2
      %s24 = sadd.s32 %s17, 1
      %s26 = sadd.s32 %s25, 1
      %p29 = scmp.eq.s32.totalorder %s17, 1
      %p30 = scmp.ne.s32.totalorder %s25, %s27
      %p31 = scmp.eq.s32.totalorder %s17, 0
      %p32 = por %p30, %p31
      %p33 = scmp.ne.s32.totalorder %s25, %s27
      %p34 = scmp.eq.s32.totalorder %s22, 1
      %p35 = por %p33, %p34
      %p36 = scmp.ne.s32.totalorder %s27, %s28
      %p37 = scmp.eq.s32.totalorder %s22, 0
      %p38 = por %p36, %p37
      %p39 = scmp.ne.s32.totalorder %s27, %s28
      %p40 = scmp.eq.s32.totalorder %s23, 1
      %p41 = por %p39, %p40
      %p43 = scmp.ne.s32.totalorder %s28, %s42
      %p44 = scmp.eq.s32.totalorder %s23, 0
      %p45 = por %p43, %p44
      %s47 = sadd.s32 %s46, 1
      %p50 = scmp.eq.s32.totalorder %s17, 1
      %p51 = scmp.ne.s32.totalorder %s46, %s48
      %p52 = scmp.eq.s32.totalorder %s17, 0
      %p53 = por %p51, %p52
      %p54 = scmp.ne.s32.totalorder %s46, %s48
      %p55 = scmp.eq.s32.totalorder %s22, 1
      %p56 = por %p54, %p55
      %p57 = scmp.ne.s32.totalorder %s48, %s49
      %p58 = scmp.eq.s32.totalorder %s22, 0
      %p59 = por %p57, %p58
      %p60 = scmp.ne.s32.totalorder %s48, %s49
      %p61 = scmp.eq.s32.totalorder %s23, 1
      %p62 = por %p60, %p61
      %p64 = scmp.ne.s32.totalorder %s49, %s63
      %p65 = scmp.eq.s32.totalorder %s23, 0
      %p66 = por %p64, %p65
      %s67 = ssub.s32 %s17, %s24
      %p68 = scmp.eq.s32.totalorder %s67, 0
      %s70 = sadd.s32 %s69, 1
      %s71 = scalar_select %p68, %s69, %s70
      %p74 = pneg %p68
      %p75 = scmp.eq.s32.totalorder %s17, 1
      %p76 = por %p74, %p75
      %p77 = scmp.ne.s32.totalorder %s69, %s72
      %p78 = scmp.eq.s32.totalorder %s17, 0
      %p79 = por %p77, %p78
      %p80 = scmp.ne.s32.totalorder %s69, %s72
      %p81 = scmp.eq.s32.totalorder %s22, 1
      %p82 = por %p80, %p81
      %p83 = scmp.ne.s32.totalorder %s72, %s73
      %p84 = scmp.eq.s32.totalorder %s22, 0
      %p85 = por %p83, %p84
      %p86 = scmp.ne.s32.totalorder %s72, %s73
      %p87 = scmp.eq.s32.totalorder %s23, 1
      %p88 = por %p86, %p87
      %p90 = scmp.ne.s32.totalorder %s73, %s89
      %p91 = scmp.eq.s32.totalorder %s23, 0
      %p92 = por %p90, %p91
      %s93 = ssub.s32 %s17, %s24
      %p94 = scmp.eq.s32.totalorder %s93, 0
      %s96 = sadd.s32 %s95, 1
      %s97 = scalar_select %p94, %s95, %s96
      %p100 = pneg %p94
      %p101 = scmp.eq.s32.totalorder %s17, 1
      %p102 = por %p100, %p101
      %p103 = scmp.ne.s32.totalorder %s95, %s98
      %p104 = scmp.eq.s32.totalorder %s17, 0
      %p105 = por %p103, %p104
      %p106 = scmp.ne.s32.totalorder %s95, %s98
      %p107 = scmp.eq.s32.totalorder %s22, 1
      %p108 = por %p106, %p107
      %p109 = scmp.ne.s32.totalorder %s98, %s99
      %p110 = scmp.eq.s32.totalorder %s22, 0
      %p111 = por %p109, %p110
      %p112 = scmp.ne.s32.totalorder %s98, %s99
      %p113 = scmp.eq.s32.totalorder %s23, 1
      %p114 = por %p112, %p113
      %p116 = scmp.ne.s32.totalorder %s99, %s115
      %p117 = scmp.eq.s32.totalorder %s23, 0
      %p118 = por %p116, %p117
      %p119 = scmp.le.s32.totalorder 1, %s17
      %p120 = scmp.lt.s32.totalorder %s17, 3
      %p121 = pnand %p119, %p120
      %p122 = pneg %p121
      // Predicated region
      $region9: #{tpu_custom_call.1} parent=5 // pred_check
        _
      $region10: #{tpu_custom_call.1} parent=5 // pred_check_branch
        %124 = sbr.rel (%p121) target = $region12
      $region11: #{tpu_custom_call.1} parent=5 // pred_region
        %s125 = ssub.s32 %s17, 1
        // Predicated region
        $region13: #{tpu_custom_call.1} parent=11 // pred_check
          %p126 = pneg %p38
        $region14: #{tpu_custom_call.1} parent=11 // pred_check_branch
          %128 = sbr.rel (%p126) target = $region16
        $region15: #{tpu_custom_call.1} parent=11 // pred_region
          _
        $region16: #{tpu_custom_call.1} parent=11 // pred_fallthru
          _
        // Predicated region
        $region17: #{tpu_custom_call.1} parent=11 // pred_check
          %p129 = pneg %p59
        $region18: #{tpu_custom_call.1} parent=11 // pred_check_branch
          %131 = sbr.rel (%p129) target = $region20
        $region19: #{tpu_custom_call.1} parent=11 // pred_region
          _
        $region20: #{tpu_custom_call.1} parent=11 // pred_fallthru
          _
      $region12: #{tpu_custom_call.1} parent=5 // pred_fallthru
        _
      %p132 = scmp.lt.s32.totalorder %s17, 2
      // Predicated region
      $region21: #{tpu_custom_call.1} parent=5 // pred_check
        %p133 = pneg %p132
      $region22: #{tpu_custom_call.1} parent=5 // pred_check_branch
        %135 = sbr.rel (%p133) target = $region24
      $region23: #{tpu_custom_call.1} parent=5 // pred_region
        // Predicated region
        $region25: #{tpu_custom_call.1} parent=23 // pred_check
          %p136 = pneg %p79
        $region26: #{tpu_custom_call.1} parent=23 // pred_check_branch
          %138 = sbr.rel (%p136) target = $region28
        $region27: #{tpu_custom_call.1} parent=23 // pred_region
          %s139 = sand.u32 %s69, 1
          %s140 = scalar_lea.sflag [#allocation5], %s139
          %s141 = sand.u32 %s69, 1
          %s142 = smul.addr %s141, 8
          %s143 = scalar_lea.vmem [#allocation4], %s142
          %s145 = ssub.s32 128, 128
          %146 = vsyncadd %s140, %s145
          %s147 = smul.addr %s17, 128
          %s148 = scalar_lea.hbm %s2, %s147
          %s150 = sshll.u32 %s143, 4
          %s151 = int_to_ptr.vmem [resolvable:$true] %s150
          %153 = dma.hbm_to_vmem [thread:$0]  %s148, 128, %s151, %s140
        $region28: #{tpu_custom_call.1} parent=23 // pred_fallthru
          _
      $region24: #{tpu_custom_call.1} parent=5 // pred_fallthru
        _
      %p154 = scmp.le.s32.totalorder 1, %s17
      %p155 = scmp.lt.s32.totalorder %s17, 3
      %p156 = pnand %p154, %p155
      %p157 = pneg %p156
      // Predicated region
      $region29: #{tpu_custom_call.1} parent=5 // pred_check
        _
      $region30: #{tpu_custom_call.1} parent=5 // pred_check_branch
        %159 = sbr.rel (%p156) target = $region32
      $region31: #{tpu_custom_call.1} parent=5 // pred_region
        %s160 = ssub.s32 %s17, 1
        %s161 = sand.u32 %s72, 1
        %s162 = scalar_lea.sflag [#allocation5], %s161
        %s163 = sand.u32 %s72, 1
        %s164 = smul.addr %s163, 8
        %s165 = scalar_lea.vmem [#allocation4], %s164
        // Predicated region
        $region33: #{tpu_custom_call.1} parent=31 // pred_check
          %p166 = pneg %p85
        $region34: #{tpu_custom_call.1} parent=31 // pred_check_branch
          %168 = sbr.rel (%p166) target = $region36
        $region35: #{tpu_custom_call.1} parent=31 // pred_region
          %169 = dma.done %s162, 128
        $region36: #{tpu_custom_call.1} parent=31 // pred_fallthru
          _
        %p170 = pneg %p38
        %p171 = pneg %p35
        %p172 = pneg %p59
        %p173 = pneg %p56
        %s174 = sand.u32 %s72, 1
        %s175 = scalar_lea.sflag [#allocation5], %s174
        %s176 = sand.u32 %s72, 1
        %s177 = smul.addr %s176, 8
        %s178 = scalar_lea.vmem [#allocation4], %s177
        %p179 = pneg %p85
        %p180 = pneg %p82
        %p181 = pneg %p111
        %p182 = pneg %p108
        %s183 = sand.u32 %s98, 1
        %s184 = scalar_lea.sflag [#allocation6], %s183
        %s185 = sand.u32 %s98, 1
        %s186 = smul.addr %s185, 8
        %s187 = scalar_lea.vmem [#allocation7], %s186
        %v188 = vld [vmem:[%s165] sm:$0xff]
        %vm189 = vcmask 261120
        %v190 = vsel %vm189, %v188, 0.0
        %191 = vadd.xlane.f32.xlu0 %v190
        %v192 = vpop.xlane.xlu0 %191
        %v193 = vrcp.pop 32.0
        %v194 = vmul.f32 %v192, %v193
        %v195 = vsub.f32 %v188, %v194
        %v196 = vmul.f32 %v195, %v195
        %v197 = vsel %vm189, %v196, 0.0
        %198 = vadd.xlane.f32.xlu0 %v197
        %v199 = vpop.xlane.xlu0 %198
        %v200 = vmul.f32 %v199, 0.032258064
        %v201 = vrsqrt.pop %v200
        %v202 = vmul.f32 %v200, %v201
        %vm203 = vcmp.eq.f32.partialorder %v200, inf
        %v204 = vsel %vm203, %v200, %v202
        %vm205 = vcmp.eq.f32.partialorder %v200, 0.0
        %v206 = vand.u32 %v200, 2147483648
        %v207 = vsel %vm205, %v206, %v204
        %v208 = vadd.f32 %v207, 1e-06
        %v209 = vrcp.pop %v208
        %s210 = sld [smem:[#allocation2]]
        %v211 = vstv %s210
        %v212 = vmul.f32 %v211, %v209
        %s213 = sld [smem:[#allocation3]]
        %v214 = vmul.f32 %v212, %v194
        %v215 = vstv %s213
        %v216 = vsub.f32 %v215, %v214
        %v217 = vmul.f32 %v212, %v188
        %v218 = vadd.f32 %v217, %v216
        %219 = vst.msk [vmem:[%s187] sm:$0xff] %vm189, %v218
        %s220 = sand.u32 %s98, 1
        %s221 = scalar_lea.sflag [#allocation6], %s220
        %s222 = sand.u32 %s98, 1
        %s223 = smul.addr %s222, 8
        %s224 = scalar_lea.vmem [#allocation7], %s223
        // Predicated region
        $region37: #{tpu_custom_call.1} parent=31 // pred_check
          %p225 = pneg %p108
        $region38: #{tpu_custom_call.1} parent=31 // pred_check_branch
          %227 = sbr.rel (%p225) target = $region40
        $region39: #{tpu_custom_call.1} parent=31 // pred_region
          %s229 = ssub.s32 128, 128
          %230 = vsyncadd %s221, %s229
          %s231 = smul.addr %s22, 128
          %s232 = scalar_lea.hbm %s3, %s231
          %s234 = sshll.u32 %s224, 4
          %s235 = int_to_ptr.vmem [resolvable:$true] %s234
          %237 = dma.vmem_to_hbm [thread:$0]  %s235, 128, %s232, %s221
        $region40: #{tpu_custom_call.1} parent=31 // pred_fallthru
          _
      $region32: #{tpu_custom_call.1} parent=5 // pred_fallthru
        _
      %p238 = scmp.le.s32.totalorder 2, %s17
      // Predicated region
      $region41: #{tpu_custom_call.1} parent=5 // pred_check
        %p239 = pneg %p238
      $region42: #{tpu_custom_call.1} parent=5 // pred_check_branch
        %241 = sbr.rel (%p239) target = $region44
      $region43: #{tpu_custom_call.1} parent=5 // pred_region
        %s242 = ssub.s32 %s17, 2
        // Predicated region
        $region45: #{tpu_custom_call.1} parent=43 // pred_check
          %p243 = pneg %p114
        $region46: #{tpu_custom_call.1} parent=43 // pred_check_branch
          %245 = sbr.rel (%p243) target = $region48
        $region47: #{tpu_custom_call.1} parent=43 // pred_region
          %s246 = sand.u32 %s99, 1
          %s247 = scalar_lea.sflag [#allocation6], %s246
          %s248 = sand.u32 %s99, 1
          %s249 = smul.addr %s248, 8
          %s250 = scalar_lea.vmem [#allocation7], %s249
          %251 = dma.done %s247, 128
        $region48: #{tpu_custom_call.1} parent=43 // pred_fallthru
          _
      $region44: #{tpu_custom_call.1} parent=5 // pred_fallthru
        _
    $region6: #{tpu_custom_call.1} parent=1 // loop_footer
      %s21 = sadd.s32 1, %s17
    $region7: #{tpu_custom_call.1} parent=1 // loop_footer_branch
      %16 = sbr.rel target = $region3
    $region8: #{tpu_custom_call.1} parent=1 // loop_exit
      _
    %252 = vsyncpa [#allocation5], 1
    %s253 = scalar_lea.sflag [#allocation5], 1
    %254 = vsyncpa %s253, 1
    %255 = vsyncpa [#allocation6], 1
    %s256 = scalar_lea.sflag [#allocation6], 1
    %257 = vsyncpa %s256, 1

</llo_original>
